<compile_context>
chip_gen: v7x
topology: tpu7x:2x2x1
jax: 0.10.0
libtpu: 0.0.40
codegen_flags: <defaults>
</compile_context>

<pallas_src>
import jax
import jax.numpy as jnp
from jax.experimental import pallas as pl
from jax.experimental.pallas import tpu as pltpu


def _round_up(x, m):
    return ((x + m - 1) // m) * m


def _class_head_kernel(w_ref, x_ref, b_ref, o_ref):
    # w_ref: (K, Cin)      compute dtype (bf16/f32), resident
    # x_ref: (Cin, TM)     compute dtype, one spatial tile of one image
    # b_ref: (K, 1)        f32, resident
    # o_ref: (K, TM)       output dtype (lane-dense stores along TM)
    acc = jnp.dot(w_ref[...], x_ref[...], preferred_element_type=jnp.float32)
    # Bias add kept in f32 vregs (v5e has no bf16 VPU), then single cast out.
    o_ref[...] = (acc + b_ref[...]).astype(o_ref.dtype)


def class_head_forward(x_nchw, weight, bias, num_anchors, num_classes, *,
                       tile_m=512, compute_dtype=jnp.bfloat16):
    """x_nchw: (N, Cin, H, W); weight: (A*nc, Cin, 1, 1); bias: (A*nc,)."""
    n, cin, h, w = x_nchw.shape
    k = num_anchors * num_classes
    assert weight.shape == (k, cin, 1, 1)
    hw = h * w
    out_dtype = x_nchw.dtype
    itemsize = jnp.dtype(compute_dtype).itemsize

    # --- tile sizing (lane dim must be a multiple of 128) -------------------
    tile_m = max(128, (tile_m // 128) * 128)
    tile_m = min(tile_m, _round_up(hw, 128))
    # Cap per-buffer x tile at ~8 MiB so double buffering fits v7x's VMEM.
    max_tile_m = max(128, ((8 * 1024 * 1024) // (cin * itemsize) // 128) * 128)
    tile_m = min(tile_m, max_tile_m)
    hw_pad = pl.cdiv(hw, tile_m) * tile_m

    # --- layout plumbing (cheap: reshape is free, pad only the tail tile) ---
    x3 = x_nchw.reshape(n, cin, hw)           # native NCHW -> (N, Cin, HW)
    if hw_pad != hw:
        x3 = jnp.pad(x3, ((0, 0), (0, 0), (0, hw_pad - hw)))
    x3 = x3.astype(compute_dtype)             # TODO(synk): upstream should emit bf16 directly
    w2 = weight.reshape(k, cin).astype(compute_dtype)
    b2 = bias.reshape(k, 1).astype(jnp.float32)

    grid = (n, hw_pad // tile_m)

    # Rough VMEM estimate: double-buffered x/out tiles + resident w/b.
    vmem_bytes = (2 * cin * tile_m * itemsize
                  + 2 * k * tile_m * jnp.dtype(out_dtype).itemsize
                  + k * cin * itemsize + k * 4)
    vmem_limit = int(min(max(2 * vmem_bytes, 32 * 1024 * 1024),
                         48 * 1024 * 1024))

    y_t = pl.pallas_call(
        _class_head_kernel,
        out_shape=jax.ShapeDtypeStruct((n, k, hw_pad), out_dtype),
        grid_spec=pltpu.PrefetchScalarGridSpec(
            num_scalar_prefetch=0,
            grid=grid,
            in_specs=[
                pl.BlockSpec((k, cin), lambda b, j: (0, 0)),            # weight (resident)
                pl.BlockSpec((None, cin, tile_m), lambda b, j: (b, 0, j)),  # x tile
                pl.BlockSpec((k, 1), lambda b, j: (0, 0)),              # bias (resident)
            ],
            out_specs=pl.BlockSpec((None, k, tile_m), lambda b, j: (b, 0, j)),
        ),
        compiler_params=pltpu.CompilerParams(
            dimension_semantics=("parallel", "parallel"),
            vmem_limit_bytes=vmem_limit,
        ),
    )(w2, x3, b2)

    # (N, K, HWpad) -> slice -> (N, HW, K) -> (N, HW*A, nc).
    # Tiny fix-up transpose (M*K elements only); ordering identical to
    # permute(0, 2, 3, 1).contiguous().view(N, -1, num_classes).
    y = jnp.transpose(y_t[:, :, :hw], (0, 2, 1))
    return y.reshape(n, hw * num_anchors, num_classes)


if __name__ == "__main__":
    # Small shapes consistent with the module (inchannels scaled down).
    N, CIN, H, W = 2, 32, 16, 16
    NUM_ANCHORS, NUM_CLASSES = 3, 2
    K = NUM_ANCHORS * NUM_CLASSES

    key = jax.random.PRNGKey(0)
    kx, kw, kb = jax.random.split(key, 3)
    x = jax.random.normal(kx, (N, CIN, H, W), dtype=jnp.float32)
    weight = jax.random.normal(kw, (K, CIN, 1, 1), dtype=jnp.float32) * 0.05
    bias = jax.random.normal(kb, (K,), dtype=jnp.float32) * 0.05

    out = class_head_forward(x, weight, bias, NUM_ANCHORS, NUM_CLASSES)
    out = jax.block_until_ready(out)

    # Reference in plain JAX with matching bf16 input rounding (f32 accumulate).
    xr = x.astype(jnp.bfloat16).astype(jnp.float32)
    wr = weight.reshape(K, CIN).astype(jnp.bfloat16).astype(jnp.float32)
    ref = (jnp.einsum("nchw,kc->nhwk", xr, wr,
                      precision=jax.lax.Precision.HIGHEST) + bias
           ).reshape(N, H * W * NUM_ANCHORS, NUM_CLASSES)

    assert out.shape == (N, H * W * NUM_ANCHORS, NUM_CLASSES)
    assert jnp.allclose(out, ref, atol=1e-4, rtol=1e-4), \
        float(jnp.max(jnp.abs(out - ref)))

    print("KERNEL_OK")
</pallas_src>

<mosaic_0001>
module attributes {stable_mosaic.version = 11 : i64} {
  func.func @_class_head_kernel(%arg0: i32, %arg1: i32, %arg2: memref<6x32xbf16, #tpu.memory_space<vmem>>, %arg3: memref<1x32x256xbf16, #tpu.memory_space<vmem>>, %arg4: memref<6x1xf32, #tpu.memory_space<vmem>>, %arg5: memref<1x6x256xf32, #tpu.memory_space<vmem>>) attributes {dimension_semantics = [#tpu.dimension_semantics<parallel>, #tpu.dimension_semantics<parallel>], iteration_bounds = array<i64: 2, 1>, scalar_prefetch = 0 : i64, scratch_operands = 0 : i64, tpu.core_type = #tpu.core_type<tc>, window_params = [{pipeline_mode = #tpu.pipeline_mode<synchronous>, transform_indices = @transform_0, window_bounds = array<i64: 6, 32>}, {transform_indices = @transform_1, window_bounds = array<i64: 1, 32, 256>}, {pipeline_mode = #tpu.pipeline_mode<synchronous>, transform_indices = @transform_2, window_bounds = array<i64: 6, 1>}, {transform_indices = @transform_3, window_bounds = array<i64: 1, 6, 256>}]} {
    %c0 = arith.constant 0 : index
    %c0_0 = arith.constant 0 : index
    %0 = vector.load %arg2[%c0, %c0_0] : memref<6x32xbf16, #tpu.memory_space<vmem>>, vector<6x32xbf16>
    %c0_1 = arith.constant 0 : index
    %c0_2 = arith.constant 0 : index
    %c0_3 = arith.constant 0 : index
    %1 = vector.load %arg3[%c0_1, %c0_2, %c0_3] : memref<1x32x256xbf16, #tpu.memory_space<vmem>>, vector<1x32x256xbf16>
    %2 = vector.shape_cast %1 : vector<1x32x256xbf16> to vector<32x256xbf16>
    %cst = arith.constant dense<0.000000e+00> : vector<6x256xf32>
    %3 = tpu.matmul %0, %2, %cst {dimension_numbers = #tpu.dot_dimension_numbers<[1], [0], [0], [1], [0, 0, 1, 1], [], []>} : vector<6x32xbf16>, vector<32x256xbf16>, vector<6x256xf32> -> vector<6x256xf32>
    %c0_4 = arith.constant 0 : index
    %c0_5 = arith.constant 0 : index
    %4 = vector.load %arg4[%c0_4, %c0_5] : memref<6x1xf32, #tpu.memory_space<vmem>>, vector<6x1xf32>
    %5 = vector.broadcast %4 : vector<6x1xf32> to vector<6x256xf32>
    %6 = arith.addf %3, %5 : vector<6x256xf32>
    %c0_6 = arith.constant 0 : index
    %c0_7 = arith.constant 0 : index
    %c0_8 = arith.constant 0 : index
    %7 = vector.load %arg5[%c0_6, %c0_7, %c0_8] : memref<1x6x256xf32, #tpu.memory_space<vmem>>, vector<1x6x256xf32>
    %8 = vector.shape_cast %7 : vector<1x6x256xf32> to vector<6x256xf32>
    %9 = vector.shape_cast %6 : vector<6x256xf32> to vector<1x6x256xf32>
    tpu.vector_store %arg5[%c0_6, %c0_7, %c0_8], %9 {strides = array<i32>} : memref<1x6x256xf32, #tpu.memory_space<vmem>>, vector<1x6x256xf32>,
    return
  }
  func.func @transform_0(%arg0: i32, %arg1: i32) -> (i32, i32) {
    %c0_i32 = arith.constant 0 : i32
    %c0_i32_0 = arith.constant 0 : i32
    %c0_i32_1 = arith.constant 0 : i32
    return %c0_i32, %c0_i32_0 : i32, i32
  }
  func.func @transform_1(%arg0: i32, %arg1: i32) -> (i32, i32, i32) {
    %c0_i32 = arith.constant 0 : i32
    %c0_i32_0 = arith.constant 0 : i32
    return %arg0, %c0_i32, %arg1 : i32, i32, i32
  }
  func.func @transform_2(%arg0: i32, %arg1: i32) -> (i32, i32) {
    %c0_i32 = arith.constant 0 : i32
    %c0_i32_0 = arith.constant 0 : i32
    %c0_i32_1 = arith.constant 0 : i32
    return %c0_i32, %c0_i32_0 : i32, i32
  }
  func.func @transform_3(%arg0: i32, %arg1: i32) -> (i32, i32, i32) {
    %c0_i32 = arith.constant 0 : i32
    %c0_i32_0 = arith.constant 0 : i32
    return %arg0, %c0_i32, %arg1 : i32, i32, i32
  }
}

</mosaic_0001>

<llo_original>
// kernel: tpu_custom_call.1
$region0: #{tpu_custom_call.1}
  #allocation0 [shape = 'u32[]', space=smem, size = 0x4, offset = 0x4, fixed_abs, tag = 'smem constant byte address 0x4 - core index']
  #allocation1 [shape = 'u32[144,128]{1,0:T(1,128)}', space=vmem, size = 0x12000, scoped, tag = 'internal scratch']
  %s0 = inlined_call_operand.vmem [shape: bf16[6,32], index: 0, kind: input, shape index: {}]
  %s1 = inlined_call_operand.hbm [shape: bf16[2,32,256], index: 1, kind: input, shape index: {}]
  %s2 = inlined_call_operand.vmem [shape: f32[6,1], index: 2, kind: input, shape index: {}]
  %s3 = inlined_call_operand.vmem [shape: f32[2,6,256], index: 3, kind: output, shape index: {}]
  %s4 = sld [smem:[#allocation0]]
  $region49: #{tpu_custom_call.1} parent=0
    _
  %s6 = ssub.s32 1, %s4
  %s7 = scalar_select 0, %s6, %s4
  $region1: #{tpu_custom_call.1} parent=0
    #allocation2 [shape = 'u8[32768]{0}', space=vmem, size = 0x8000, scoped, tag = 'input window, operand 1']
    #allocation3 [shape = 's32[2]{0}', space=sflag, size = 0x8, scoped, tag = 'scoped memory for tpu_custom_call.1']
    %8 = vsyncpa [#allocation3], 0
    %s9 = scalar_lea.sflag [#allocation3], 1
    %10 = vsyncpa %s9, 0
    loop: start=0, step=1, limit=4
    $region2: #{tpu_custom_call.1} parent=1 // loop_pre_header
      _
    $region3: #{tpu_custom_call.1} parent=1 // loop_header
      %s12 = sphi 0, %s16
      %p13 = scmp.ge.s32.totalorder %s12, 4
      %s19 = sphi 0, %s31
      %s20 = sphi 0, %s27
      %s21 = sphi 0, %s19
      %s22 = sphi 0, %s20
      %s23 = sphi 0, %s21
      %s24 = sphi 0, %s22
      %s32 = sphi 0, %s32
      %s34 = sphi 0, %s32
      %s35 = sphi 0, %s34
      %s49 = sphi 0, %s35
      %s57 = sphi 0, %s59
      %s60 = sphi 0, %s57
      %s61 = sphi 0, %s60
      %s77 = sphi 0, %s61
      %s81 = sphi 0, %s81
      %s83 = sphi 0, %s81
      %s84 = sphi 0, %s83
      %s98 = sphi 0, %s84
      %s106 = sphi 0, %s108
      %s109 = sphi 0, %s106
      %s110 = sphi 0, %s109
      %s126 = sphi 0, %s110
    $region4: #{tpu_custom_call.1} parent=1 // loop_header_branch
      %15 = sbr.rel (%p13) target = $region8
    $region5: #{tpu_custom_call.1} parent=1 // loop_body
      %s17 = ssub.s32 %s12, 1
      %s18 = ssub.s32 %s12, 2
      %s25 = sadd.s32 1, %s20
      %p26 = scmp.ge.s32.totalorder %s25, 1
      %s27 = scalar_select %p26, 0, %s25
      %s28 = sadd.s32 1, %s19
      %s29 = scalar_select %p26, %s28, %s19
      %p30 = scmp.ge.s32.totalorder %s29, 2
      %s31 = scalar_select %p30, 0, %s29
      %s33 = sadd.s32 %s32, 1
      %p36 = scmp.eq.s32.totalorder %s12, 1
      %p37 = scmp.ne.s32.totalorder %s32, %s34
      %p38 = scmp.eq.s32.totalorder %s12, 0
      %p39 = por %p37, %p38
      %p40 = scmp.ne.s32.totalorder %s32, %s34
      %p41 = scmp.eq.s32.totalorder %s17, 1
      %p42 = por %p40, %p41
      %p43 = scmp.ne.s32.totalorder %s34, %s35
      %p44 = scmp.eq.s32.totalorder %s17, 0
      %p45 = por %p43, %p44
      %p46 = scmp.ne.s32.totalorder %s34, %s35
      %p47 = scmp.eq.s32.totalorder %s18, 1
      %p48 = por %p46, %p47
      %p50 = scmp.ne.s32.totalorder %s35, %s49
      %p51 = scmp.eq.s32.totalorder %s18, 0
      %p52 = por %p50, %p51
      %s53 = ssub.s32 %s19, %s31
      %s54 = ssub.s32 %s20, %s27
      %s55 = sor.u32 %s53, %s54
      %p56 = scmp.eq.s32.totalorder %s55, 0
      %s58 = sadd.s32 %s57, 1
      %s59 = scalar_select %p56, %s57, %s58
      %p62 = pneg %p56
      %p63 = scmp.eq.s32.totalorder %s12, 1
      %p64 = por %p62, %p63
      %p65 = scmp.ne.s32.totalorder %s57, %s60
      %p66 = scmp.eq.s32.totalorder %s12, 0
      %p67 = por %p65, %p66
      %p68 = scmp.ne.s32.totalorder %s57, %s60
      %p69 = scmp.eq.s32.totalorder %s17, 1
      %p70 = por %p68, %p69
      %p71 = scmp.ne.s32.totalorder %s60, %s61
      %p72 = scmp.eq.s32.totalorder %s17, 0
      %p73 = por %p71, %p72
      %p74 = scmp.ne.s32.totalorder %s60, %s61
      %p75 = scmp.eq.s32.totalorder %s18, 1
      %p76 = por %p74, %p75
      %p78 = scmp.ne.s32.totalorder %s61, %s77
      %p79 = scmp.eq.s32.totalorder %s18, 0
      %p80 = por %p78, %p79
      %s82 = sadd.s32 %s81, 1
      %p85 = scmp.eq.s32.totalorder %s12, 1
      %p86 = scmp.ne.s32.totalorder %s81, %s83
      %p87 = scmp.eq.s32.totalorder %s12, 0
      %p88 = por %p86, %p87
      %p89 = scmp.ne.s32.totalorder %s81, %s83
      %p90 = scmp.eq.s32.totalorder %s17, 1
      %p91 = por %p89, %p90
      %p92 = scmp.ne.s32.totalorder %s83, %s84
      %p93 = scmp.eq.s32.totalorder %s17, 0
      %p94 = por %p92, %p93
      %p95 = scmp.ne.s32.totalorder %s83, %s84
      %p96 = scmp.eq.s32.totalorder %s18, 1
      %p97 = por %p95, %p96
      %p99 = scmp.ne.s32.totalorder %s84, %s98
      %p100 = scmp.eq.s32.totalorder %s18, 0
      %p101 = por %p99, %p100
      %s102 = ssub.s32 %s19, %s31
      %s103 = ssub.s32 %s20, %s27
      %s104 = sor.u32 %s102, %s103
      %p105 = scmp.eq.s32.totalorder %s104, 0
      %s107 = sadd.s32 %s106, 1
      %s108 = scalar_select %p105, %s106, %s107
      %p111 = pneg %p105
      %p112 = scmp.eq.s32.totalorder %s12, 1
      %p113 = por %p111, %p112
      %p114 = scmp.ne.s32.totalorder %s106, %s109
      %p115 = scmp.eq.s32.totalorder %s12, 0
      %p116 = por %p114, %p115
      %p117 = scmp.ne.s32.totalorder %s106, %s109
      %p118 = scmp.eq.s32.totalorder %s17, 1
      %p119 = por %p117, %p118
      %p120 = scmp.ne.s32.totalorder %s109, %s110
      %p121 = scmp.eq.s32.totalorder %s17, 0
      %p122 = por %p120, %p121
      %p123 = scmp.ne.s32.totalorder %s109, %s110
      %p124 = scmp.eq.s32.totalorder %s18, 1
      %p125 = por %p123, %p124
      %p127 = scmp.ne.s32.totalorder %s110, %s126
      %p128 = scmp.eq.s32.totalorder %s18, 0
      %p129 = por %p127, %p128
      %p130 = scmp.le.s32.totalorder 1, %s12
      %p131 = scmp.lt.s32.totalorder %s12, 3
      %p132 = pnand %p130, %p131
      %p133 = pneg %p132
      // Predicated region
      $region9: #{tpu_custom_call.1} parent=5 // pred_check
        _
      $region10: #{tpu_custom_call.1} parent=5 // pred_check_branch
        %135 = sbr.rel (%p132) target = $region12
      $region11: #{tpu_custom_call.1} parent=5 // pred_region
        %s136 = ssub.s32 %s12, 1
        // Predicated region
        $region13: #{tpu_custom_call.1} parent=11 // pred_check
          %p137 = pneg %p45
        $region14: #{tpu_custom_call.1} parent=11 // pred_check_branch
          %139 = sbr.rel (%p137) target = $region16
        $region15: #{tpu_custom_call.1} parent=11 // pred_region
          _
        $region16: #{tpu_custom_call.1} parent=11 // pred_fallthru
          _
        // Predicated region
        $region17: #{tpu_custom_call.1} parent=11 // pred_check
          %p140 = pneg %p94
        $region18: #{tpu_custom_call.1} parent=11 // pred_check_branch
          %142 = sbr.rel (%p140) target = $region20
        $region19: #{tpu_custom_call.1} parent=11 // pred_region
          _
        $region20: #{tpu_custom_call.1} parent=11 // pred_fallthru
          _
      $region12: #{tpu_custom_call.1} parent=5 // pred_fallthru
        _
      %p143 = scmp.lt.s32.totalorder %s12, 2
      // Predicated region
      $region21: #{tpu_custom_call.1} parent=5 // pred_check
        %p144 = pneg %p143
      $region22: #{tpu_custom_call.1} parent=5 // pred_check_branch
        %146 = sbr.rel (%p144) target = $region24
      $region23: #{tpu_custom_call.1} parent=5 // pred_region
        // Predicated region
        $region25: #{tpu_custom_call.1} parent=23 // pred_check
          %p147 = pneg %p67
        $region26: #{tpu_custom_call.1} parent=23 // pred_check_branch
          %149 = sbr.rel (%p147) target = $region28
        $region27: #{tpu_custom_call.1} parent=23 // pred_region
          %s150 = sand.u32 %s57, 1
          %s151 = scalar_lea.sflag [#allocation3], %s150
          %s152 = sand.u32 %s57, 1
          %s153 = smul.addr %s152, 32
          %s154 = scalar_lea.vmem [#allocation2], %s153
          %s155 = smul.u32 2, %s20
          %s157 = ssub.s32 512, 512
          %158 = vsyncadd %s151, %s157
          %s159 = smul.addr %s19, 8
          %s160 = sadd.s32 %s155, %s159
          %s161 = smul.addr %s160, 64
          %s162 = scalar_lea.hbm %s1, %s161
          %s163 = sshll.u32 %s154, 4
          %s164 = int_to_ptr.vmem [resolvable:$true] %s163
          %169 = dma.hbm_to_vmem [thread:$0]  %s162, 512, %s164, %s151, 128, 128, 8
        $region28: #{tpu_custom_call.1} parent=23 // pred_fallthru
          _
      $region24: #{tpu_custom_call.1} parent=5 // pred_fallthru
        _
      %p170 = scmp.le.s32.totalorder 1, %s12
      %p171 = scmp.lt.s32.totalorder %s12, 3
      %p172 = pnand %p170, %p171
      %p173 = pneg %p172
      // Predicated region
      $region29: #{tpu_custom_call.1} parent=5 // pred_check
        _
      $region30: #{tpu_custom_call.1} parent=5 // pred_check_branch
        %175 = sbr.rel (%p172) target = $region32
      $region31: #{tpu_custom_call.1} parent=5 // pred_region
        %s176 = ssub.s32 %s12, 1
        %s177 = sand.u32 %s60, 1
        %s178 = scalar_lea.sflag [#allocation3], %s177
        %s179 = sand.u32 %s60, 1
        %s180 = smul.addr %s179, 32
        %s181 = scalar_lea.vmem [#allocation2], %s180
        // Predicated region
        $region33: #{tpu_custom_call.1} parent=31 // pred_check
          %p182 = pneg %p73
        $region34: #{tpu_custom_call.1} parent=31 // pred_check_branch
          %184 = sbr.rel (%p182) target = $region36
        $region35: #{tpu_custom_call.1} parent=31 // pred_region
          %185 = dma.done %s178, 512
        $region36: #{tpu_custom_call.1} parent=31 // pred_fallthru
          _
        %p186 = pneg %p45
        %p187 = pneg %p42
        %s188 = sand.u32 %s60, 1
        %s189 = scalar_lea.sflag [#allocation3], %s188
        %s190 = sand.u32 %s60, 1
        %s191 = smul.addr %s190, 32
        %s192 = scalar_lea.vmem [#allocation2], %s191
        %p193 = pneg %p73
        %p194 = pneg %p70
        %p195 = pneg %p94
        %p196 = pneg %p91
        %p197 = pneg %p122
        %p198 = pneg %p119
        %s199 = smul.u32 2, %s22
        %p200 = scmp.lt.s32.totalorder %s21, 1
        %s201 = scalar_select %p200, %s21, 1
        %p202 = scmp.lt.s32.totalorder %s199, 1
        %s203 = scalar_select %p202, %s199, 1
        %s204 = smul.addr %s201, 2
        %s205 = sadd.s32 %s203, %s204
        %s206 = smul.addr %s205, 8
        %s207 = scalar_lea.vmem %s3, %s206
        %s208 = smul.u32 2, %s22
        %s209 = smul.u32 2, %s22
        %p210 = scmp.lt.s32.totalorder %s21, 1
        %s211 = scalar_select %p210, %s21, 1
        %p212 = scmp.lt.s32.totalorder %s209, 1
        %s213 = scalar_select %p212, %s209, 1
        %s214 = smul.addr %s211, 2
        %s215 = sadd.s32 %s213, %s214
        %s216 = smul.addr %s215, 8
        %s217 = scalar_lea.vmem %s3, %s216
        %s218 = smul.u32 2, %s22
        %v220 = vld [vmem:[%s0] sm:$0x7]
        %v221 = vld [vmem:[%s181] sm:$0xff]
        %v222 = vld [vmem:[%s181 + $0x8] sm:$0xff]
        %v223 = vld [vmem:[%s181 + $0x10] sm:$0xff]
        %v224 = vld [vmem:[%s181 + $0x18] sm:$0xff]
        %v225 = vld [vmem:[%s2] sm:$0x3f]
        %227 = vset.pattern.permute.xlu0 0
        %228 = vperm.xlu0 %227, %v225
        %v229 = vpop.permute.xlu0 %228
        %v235 = vunpack.c.l.b16 %v221
        %v236 = vunpack.c.h.b16 %v221
        %v237 = vunpack.c.l.b16 %v222
        %v238 = vunpack.c.h.b16 %v222
        %v239 = vunpack.c.l.b16 %v223
        %v240 = vunpack.c.h.b16 %v223
        %v241 = vunpack.c.l.b16 %v224
        %v242 = vunpack.c.h.b16 %v224
        %v243 = vpack.c.b16 %v237, %v235
        %v244 = vpack.c.b16 %v238, %v236
        %v245 = vpack.c.b16 %v241, %v239
        %v246 = vpack.c.b16 %v242, %v240
        %vm251 = vcmask 261120
        %v253 = vsel %vm251, %v220, 0
        %255 = vmatprep.subr.bf16.mxu0 %v244
        %256 = vmatpush1.bf16.msra.mxu0 %v243
        %257 = vmatprep.subr.bf16.mxu0 %v246
        %258 = vmatpush1.bf16.msra.mxu0 %v245
        %259 = vmatprep.subr.bf16.mxu0 0
        %260 = vmatpush1.bf16.msra.mxu0 0
        %261 = vmatprep.subr.bf16.mxu0 0
        %262 = vmatpush1.bf16.msra.mxu0 0
        %263 = vmatprep.subr.bf16.mxu0 0
        %264 = vmatpush1.bf16.msra.mxu0 0
        %265 = vmatprep.subr.bf16.mxu0 0
        %266 = vmatpush1.bf16.msra.mxu0 0
        %267 = vmatprep.subr.bf16.mxu0 0
        %268 = vmatpush1.bf16.msra.mxu0 0
        %269 = vmatprep.subr.bf16.mxu0 0
        %270 = vmatpush1.bf16.msra.mxu0 0
        %271 = vmatprep.subr.bf16.mxu0 0
        %272 = vmatpush1.bf16.msra.mxu0 0
        %273 = vmatprep.subr.bf16.mxu0 0
        %274 = vmatpush1.bf16.msra.mxu0 0
        %275 = vmatprep.subr.bf16.mxu0 0
        %276 = vmatpush1.bf16.msra.mxu0 0
        %277 = vmatprep.subr.bf16.mxu0 0
        %278 = vmatpush1.bf16.msra.mxu0 0
        %279 = vmatprep.subr.bf16.mxu0 0
        %280 = vmatpush1.bf16.msra.mxu0 0
        %281 = vmatprep.subr.bf16.mxu0 0
        %282 = vmatpush1.bf16.msra.mxu0 0
        %283 = vmatprep.subr.bf16.mxu0 0
        %284 = vmatpush1.bf16.msra.mxu0 0
        %285 = vmatprep.subr.bf16.mxu0 0
        %286 = vmatpush1.bf16.msra.mxu0 0
        %287 = vmatprep.mubr.bf16.mxu0 0
        %288 = vmatmul.mubr.bf16.gmra.mrb[0].mxu0 %v253
        %v289 = vpop.f32.mrb[0].mxu0
        %v290 = vadd.f32 %v229, %v289
        %v291 = vpop.f32.mrb[0].mxu0
        %v292 = vadd.f32 %v229, %v291
        %v293 = vpop.f32.mrb[0].mxu0
        %v294 = vpop.f32.mrb[0].mxu0
        %295 = vdwg.mxu0
        %296 = vst [vmem:[%s217] sm:$0x3f] %v290
        %297 = vst [vmem:[%s217 + $0x8] sm:$0x3f] %v292
        %s298 = smul.u32 2, %s22
        %p299 = scmp.lt.s32.totalorder %s21, 1
        %s300 = scalar_select %p299, %s21, 1
        %p301 = scmp.lt.s32.totalorder %s298, 1
        %s302 = scalar_select %p301, %s298, 1
        %s303 = smul.addr %s300, 2
        %s304 = sadd.s32 %s302, %s303
        %s305 = smul.addr %s304, 8
        %s306 = scalar_lea.vmem %s3, %s305
        // Predicated region
        $region37: #{tpu_custom_call.1} parent=31 // pred_check
          %p307 = pneg %p119
        $region38: #{tpu_custom_call.1} parent=31 // pred_check_branch
          %309 = sbr.rel (%p307) target = $region40
        $region39: #{tpu_custom_call.1} parent=31 // pred_region
          %s310 = smul.u32 2, %s22
        $region40: #{tpu_custom_call.1} parent=31 // pred_fallthru
          _
      $region32: #{tpu_custom_call.1} parent=5 // pred_fallthru
        _
      %p311 = scmp.le.s32.totalorder 2, %s12
      // Predicated region
      $region41: #{tpu_custom_call.1} parent=5 // pred_check
        %p312 = pneg %p311
      $region42: #{tpu_custom_call.1} parent=5 // pred_check_branch
        %314 = sbr.rel (%p312) target = $region44
      $region43: #{tpu_custom_call.1} parent=5 // pred_region
        %s315 = ssub.s32 %s12, 2
        // Predicated region
        $region45: #{tpu_custom_call.1} parent=43 // pred_check
          %p316 = pneg %p125
        $region46: #{tpu_custom_call.1} parent=43 // pred_check_branch
          %318 = sbr.rel (%p316) target = $region48
        $region47: #{tpu_custom_call.1} parent=43 // pred_region
          %s319 = smul.u32 2, %s24
          %p320 = scmp.lt.s32.totalorder %s23, 1
          %s321 = scalar_select %p320, %s23, 1
          %p322 = scmp.lt.s32.totalorder %s319, 1
          %s323 = scalar_select %p322, %s319, 1
          %s324 = smul.addr %s321, 2
          %s325 = sadd.s32 %s323, %s324
          %s326 = smul.addr %s325, 8
          %s327 = scalar_lea.vmem %s3, %s326
        $region48: #{tpu_custom_call.1} parent=43 // pred_fallthru
          _
      $region44: #{tpu_custom_call.1} parent=5 // pred_fallthru
        _
    $region6: #{tpu_custom_call.1} parent=1 // loop_footer
      %s16 = sadd.s32 1, %s12
    $region7: #{tpu_custom_call.1} parent=1 // loop_footer_branch
      %11 = sbr.rel target = $region3
    $region8: #{tpu_custom_call.1} parent=1 // loop_exit
      _
    %328 = vsyncpa [#allocation3], 1
    %s329 = scalar_lea.sflag [#allocation3], 1
    %330 = vsyncpa %s329, 1

</llo_original>
